<compile_context>
chip_gen: v7x
topology: tpu7x:2x2x1
jax: 0.10.0
libtpu: 0.0.40
codegen_flags: <defaults>
</compile_context>

<pallas_src>
import functools

import jax
import jax.numpy as jnp
from jax import lax
from jax.experimental import pallas as pl
from jax.experimental.pallas import tpu as pltpu

BN_EPS = 1e-5
LANES = 128
SUBLANES = 8
MAX_TILE_ROWS = 16384            # upper cap; VMEM budget usually binds first


def _round_up(x, m):
    return (x + m - 1) // m * m


def _vmem_capacity_bytes():
    """Physical VMEM of the attached TPU; conservative fallback if unavailable."""
    try:
        return int(pltpu.get_tpu_info().vmem_capacity_bytes)
    except Exception:
        return 64 * 1024 * 1024  # exact for v7x, safe lower bound for v5e/v6e


def _pick_tile_rows(din, dout, row_budget_bytes):
    """Rows per tile from a VMEM byte budget (lane-padding + double-buffer aware)."""
    din_l = _round_up(din, LANES)    # x block is lane-padded in VMEM (din=4 -> 128)
    dout_l = _round_up(dout, LANES)  # out block / f32 y temp also lane-padded
    # 2x double-buffered x block + 2x double-buffered out block + 1x f32 y temp.
    bytes_per_row = 4 * (2 * din_l + 2 * dout_l + dout_l)
    tm = row_budget_bytes // bytes_per_row
    tm = max(SUBLANES, (tm // SUBLANES) * SUBLANES)
    return min(tm, MAX_TILE_ROWS)


def _encode_kernel(x_ref, w_ref, scale_ref, shift_ref, o_ref):
    """o = (x @ W) * scale + shift  (Linear bias + BatchNorm folded into scale/shift)."""
    y = jnp.dot(x_ref[...], w_ref[...], preferred_element_type=jnp.float32)
    o_ref[...] = (y * scale_ref[...] + shift_ref[...]).astype(o_ref.dtype)


def _bn_scale_shift(x, w, gamma, beta):
    """Fused BN(training-mode, biased var) scale/shift for y = x @ W.

    Uses centered Gram statistics of X:
        mean_y = mean_x @ W
        var_y  = diag(W^T (Xc^T Xc) W) / n,  Xc = X - mean_x
    Cost is O(N*din^2 + din^2*dout), negligible vs the N x din x dout
    projection, so plain jnp (XLA) is used here by design.
    """
    n = x.shape[0]
    xf = x.astype(jnp.float32)
    wf = w.astype(jnp.float32)
    inv_n = jnp.float32(1.0 / n)
    mean_x = jnp.sum(xf, axis=0, keepdims=True) * inv_n                   # [1, din]
    xc = xf - mean_x
    gram_c = jnp.dot(xc.T, xc, preferred_element_type=jnp.float32)        # [din, din]
    mean_y = jnp.dot(mean_x, wf)                                          # [1, dout]
    var_y = jnp.maximum(
        jnp.sum(jnp.dot(gram_c, wf) * wf, axis=0, keepdims=True) * inv_n, 0.0)
    scale = gamma.reshape(1, -1).astype(jnp.float32) * lax.rsqrt(var_y + BN_EPS)
    shift = beta.reshape(1, -1).astype(jnp.float32) - mean_y * scale
    return scale, shift


@functools.partial(jax.jit, static_argnames=("out_dtype",))
def linear_bn(x, w, gamma, beta, out_dtype=jnp.float32):
    """y = x @ W (bias omitted: cancels under BN centering) followed by
    BatchNorm1d training-mode forward over axis 0.  Returns [n, dout]."""
    n, din = x.shape
    dout = w.shape[1]
    if n == 0:  # empty graph / no edges: nothing to encode
        return jnp.zeros((0, dout), out_dtype)

    scale, shift = _bn_scale_shift(x, w, gamma, beta)

    vmem_cap = _vmem_capacity_bytes()
    vmem_limit = min(int(vmem_cap * 0.75), 100 * 1024 * 1024)
    tm = _pick_tile_rows(din, dout, int(vmem_limit * 0.6))
    if n <= tm:
        tm = n  # single block; block dim == full array dim is always legal

    out = pl.pallas_call(
        _encode_kernel,
        out_shape=jax.ShapeDtypeStruct((n, dout), out_dtype),
        grid_spec=pltpu.PrefetchScalarGridSpec(
            num_scalar_prefetch=0,
            grid=(pl.cdiv(n, tm),),
            in_specs=[
                pl.BlockSpec((tm, din), lambda i: (i, 0)),
                pl.BlockSpec((din, dout), lambda i: (0, 0)),
                pl.BlockSpec((1, dout), lambda i: (0, 0)),
                pl.BlockSpec((1, dout), lambda i: (0, 0)),
            ],
            # True-width output: no 128-lane padding and no wrapper slice.
            out_specs=pl.BlockSpec((tm, dout), lambda i: (i, 0)),
        ),
        compiler_params=pltpu.CompilerParams(
            dimension_semantics=("parallel",),
            vmem_limit_bytes=vmem_limit),
    )(x.astype(jnp.float32), w.astype(jnp.float32), scale, shift)
    return out


class FeatureEncoderPallas:
    """Mirror of GraphGym FeatureEncoder.forward: node encoder (+BN) on
    batch['x'], edge encoder (+BN) on batch['edge_attr']."""

    def __init__(self, node_dim_in, edge_dim_in, dim_inner, edge_dim, key):
        k0, k1, k2, k3 = jax.random.split(key, 4)
        s_n = 1.0 / jnp.sqrt(jnp.float32(node_dim_in))
        s_e = 1.0 / jnp.sqrt(jnp.float32(edge_dim_in))
        self.node_w = jax.random.uniform(
            k0, (node_dim_in, dim_inner), jnp.float32, -s_n, s_n)
        # Linear biases kept as parameters for module fidelity, but NOT fed to
        # the kernel: BN mean-centering cancels them exactly (verified below).
        self.node_b = jax.random.uniform(
            k1, (dim_inner,), jnp.float32, -s_n, s_n)
        self.node_gamma = jnp.ones((dim_inner,), jnp.float32)
        self.node_beta = jnp.zeros((dim_inner,), jnp.float32)

        self.edge_w = jax.random.uniform(
            k2, (edge_dim_in, edge_dim), jnp.float32, -s_e, s_e)
        self.edge_b = jax.random.uniform(
            k3, (edge_dim,), jnp.float32, -s_e, s_e)
        self.edge_gamma = jnp.ones((edge_dim,), jnp.float32)
        self.edge_beta = jnp.zeros((edge_dim,), jnp.float32)

    def __call__(self, batch):
        # TODO(synk): BatchNorm1d running_mean/running_var updates (training
        # side-effects) are not implemented; this is the normalization forward.
        batch = dict(batch)
        batch["x"] = linear_bn(
            batch["x"], self.node_w, self.node_gamma, self.node_beta)
        batch["edge_attr"] = linear_bn(
            batch["edge_attr"], self.edge_w, self.edge_gamma, self.edge_beta)
        return batch


if __name__ == "__main__":
    key = jax.random.PRNGKey(0)
    k_node, k_edge, k_params = jax.random.split(key, 3)

    num_nodes, node_dim_in = 16, 4
    num_edges, edge_dim_in = 32, 4
    dim_inner, edge_dim = 32, 16

    batch = {
        "x": jax.random.normal(k_node, (num_nodes, node_dim_in), jnp.float32),
        "edge_attr": jax.random.normal(
            k_edge, (num_edges, edge_dim_in), jnp.float32),
    }

    encoder = FeatureEncoderPallas(
        node_dim_in, edge_dim_in, dim_inner, edge_dim, k_params)

    out = encoder(batch)
    jax.block_until_ready(out["x"])
    jax.block_until_ready(out["edge_attr"])

    # Reference includes the Linear bias to verify the bias-cancellation claim.
    def ref(x, w, b, g, be):
        y = x @ w + b
        m = y.mean(0, keepdims=True)
        v = ((y - m) ** 2).mean(0, keepdims=True)
        return (y - m) / jnp.sqrt(v + BN_EPS) * g + be

    ref_x = ref(batch["x"], encoder.node_w, encoder.node_b,
                encoder.node_gamma, encoder.node_beta)
    ref_e = ref(batch["edge_attr"], encoder.edge_w, encoder.edge_b,
                encoder.edge_gamma, encoder.edge_beta)
    assert out["x"].shape == (num_nodes, dim_inner)
    assert out["edge_attr"].shape == (num_edges, edge_dim)
    assert jnp.allclose(out["x"], ref_x, atol=2e-4), "node path mismatch"
    assert jnp.allclose(out["edge_attr"], ref_e, atol=2e-4), "edge path mismatch"
    print("KERNEL_OK")
</pallas_src>

<mosaic_0001>
module attributes {stable_mosaic.version = 11 : i64} {
  func.func @_encode_kernel(%arg0: i32, %arg1: memref<16x4xf32, #tpu.memory_space<vmem>>, %arg2: memref<4x32xf32, #tpu.memory_space<vmem>>, %arg3: memref<1x32xf32, #tpu.memory_space<vmem>>, %arg4: memref<1x32xf32, #tpu.memory_space<vmem>>, %arg5: memref<16x32xf32, #tpu.memory_space<vmem>>) attributes {dimension_semantics = [#tpu.dimension_semantics<parallel>], iteration_bounds = array<i64: 1>, scalar_prefetch = 0 : i64, scratch_operands = 0 : i64, tpu.core_type = #tpu.core_type<tc>, window_params = [{transform_indices = @transform_0, window_bounds = array<i64: 16, 4>}, {pipeline_mode = #tpu.pipeline_mode<synchronous>, transform_indices = @transform_1, window_bounds = array<i64: 4, 32>}, {pipeline_mode = #tpu.pipeline_mode<synchronous>, transform_indices = @transform_2, window_bounds = array<i64: 1, 32>}, {pipeline_mode = #tpu.pipeline_mode<synchronous>, transform_indices = @transform_3, window_bounds = array<i64: 1, 32>}, {transform_indices = @transform_4, window_bounds = array<i64: 16, 32>}]} {
    %c0 = arith.constant 0 : index
    %c0_0 = arith.constant 0 : index
    %0 = vector.load %arg1[%c0, %c0_0] : memref<16x4xf32, #tpu.memory_space<vmem>>, vector<16x4xf32>
    %c0_1 = arith.constant 0 : index
    %c0_2 = arith.constant 0 : index
    %1 = vector.load %arg2[%c0_1, %c0_2] : memref<4x32xf32, #tpu.memory_space<vmem>>, vector<4x32xf32>
    %cst = arith.constant dense<0.000000e+00> : vector<16x32xf32>
    %2 = tpu.matmul %0, %1, %cst {dimension_numbers = #tpu.dot_dimension_numbers<[1], [0], [0], [1], [0, 0, 1, 1], [], []>} : vector<16x4xf32>, vector<4x32xf32>, vector<16x32xf32> -> vector<16x32xf32>
    %c0_3 = arith.constant 0 : index
    %c0_4 = arith.constant 0 : index
    %3 = vector.load %arg3[%c0_3, %c0_4] : memref<1x32xf32, #tpu.memory_space<vmem>>, vector<1x32xf32>
    %4 = vector.broadcast %3 : vector<1x32xf32> to vector<16x32xf32>
    %5 = arith.mulf %2, %4 : vector<16x32xf32>
    %c0_5 = arith.constant 0 : index
    %c0_6 = arith.constant 0 : index
    %6 = vector.load %arg4[%c0_5, %c0_6] : memref<1x32xf32, #tpu.memory_space<vmem>>, vector<1x32xf32>
    %7 = vector.broadcast %6 : vector<1x32xf32> to vector<16x32xf32>
    %8 = arith.addf %5, %7 : vector<16x32xf32>
    %c0_7 = arith.constant 0 : index
    %c0_8 = arith.constant 0 : index
    %9 = vector.load %arg5[%c0_7, %c0_8] : memref<16x32xf32, #tpu.memory_space<vmem>>, vector<16x32xf32>
    tpu.vector_store %arg5[%c0_7, %c0_8], %8 {strides = array<i32>} : memref<16x32xf32, #tpu.memory_space<vmem>>, vector<16x32xf32>,
    return
  }
  func.func @transform_0(%arg0: i32) -> (i32, i32) {
    %c0_i32 = arith.constant 0 : i32
    %c0_i32_0 = arith.constant 0 : i32
    return %arg0, %c0_i32 : i32, i32
  }
  func.func @transform_1(%arg0: i32) -> (i32, i32) {
    %c0_i32 = arith.constant 0 : i32
    %c0_i32_0 = arith.constant 0 : i32
    %c0_i32_1 = arith.constant 0 : i32
    return %c0_i32, %c0_i32_0 : i32, i32
  }
  func.func @transform_2(%arg0: i32) -> (i32, i32) {
    %c0_i32 = arith.constant 0 : i32
    %c0_i32_0 = arith.constant 0 : i32
    %c0_i32_1 = arith.constant 0 : i32
    return %c0_i32, %c0_i32_0 : i32, i32
  }
  func.func @transform_3(%arg0: i32) -> (i32, i32) {
    %c0_i32 = arith.constant 0 : i32
    %c0_i32_0 = arith.constant 0 : i32
    %c0_i32_1 = arith.constant 0 : i32
    return %c0_i32, %c0_i32_0 : i32, i32
  }
  func.func @transform_4(%arg0: i32) -> (i32, i32) {
    %c0_i32 = arith.constant 0 : i32
    %c0_i32_0 = arith.constant 0 : i32
    return %arg0, %c0_i32 : i32, i32
  }
}

</mosaic_0001>

<llo_original>
// kernel: linear_bn.1
$region0: #{linear_bn.1}
  #allocation0 [shape = 'u32[]', space=smem, size = 0x4, offset = 0x4, fixed_abs, tag = 'smem constant byte address 0x4 - core index']
  #allocation1 [shape = 'u32[144,128]{1,0:T(1,128)}', space=vmem, size = 0x12000, scoped, tag = 'internal scratch']
  %s0 = inlined_call_operand.vmem [shape: f32[16,4], index: 0, kind: input, shape index: {}]
  %s1 = inlined_call_operand.vmem [shape: f32[4,32], index: 1, kind: input, shape index: {}]
  %s2 = inlined_call_operand.vmem [shape: f32[1,32], index: 2, kind: input, shape index: {}]
  %s3 = inlined_call_operand.vmem [shape: f32[1,32], index: 3, kind: input, shape index: {}]
  %s4 = inlined_call_operand.hbm [shape: f32[16,32], index: 4, kind: output, shape index: {}]
  %s5 = sld [smem:[#allocation0]]
  $region26: #{linear_bn.1} parent=0
    _
  %s7 = ssub.s32 1, %s5
  %s8 = scalar_select 0, %s7, %s5
  $region1: #{linear_bn.1} parent=0
    #allocation2 [shape = 'u8[8192]{0}', space=vmem, size = 0x2000, scoped, tag = 'output window, operand 0, single buffered']
    #allocation3 [shape = 's32[1]{0}', space=sflag, size = 0x4, scoped, tag = 'scoped memory for linear_bn.1']
    %9 = vsyncpa [#allocation3], 0
    // Predicated region
    $region2: #{linear_bn.1} parent=1 // pred_check
      _
    $region3: #{linear_bn.1} parent=1 // pred_check_branch
      %11 = sbr.rel (0) target = $region5
    $region4: #{linear_bn.1} parent=1 // pred_region
      _
    $region5: #{linear_bn.1} parent=1 // pred_fallthru
      _
    // Predicated region
    $region6: #{linear_bn.1} parent=1 // pred_check
      _
    $region7: #{linear_bn.1} parent=1 // pred_check_branch
      %13 = sbr.rel (0) target = $region9
    $region8: #{linear_bn.1} parent=1 // pred_region
      _
    $region9: #{linear_bn.1} parent=1 // pred_fallthru
      _
    // Predicated region
    $region10: #{linear_bn.1} parent=1 // pred_check
      _
    $region11: #{linear_bn.1} parent=1 // pred_check_branch
      %15 = sbr.rel (0) target = $region13
    $region12: #{linear_bn.1} parent=1 // pred_region
      _
    $region13: #{linear_bn.1} parent=1 // pred_fallthru
      _
    // Predicated region
    $region14: #{linear_bn.1} parent=1 // pred_check
      _
    $region15: #{linear_bn.1} parent=1 // pred_check_branch
      %17 = sbr.rel (0) target = $region17
    $region16: #{linear_bn.1} parent=1 // pred_region
      _
    $region17: #{linear_bn.1} parent=1 // pred_fallthru
      _
    %v18 = vld [vmem:[%s0] sm:$0xff]
    %v19 = vld [vmem:[%s0 + $0x8] sm:$0xff]
    %v20 = vld [vmem:[%s1] sm:$0xf]
    %vm21 = vcmask 31744
    %v23 = vsel %vm21, %v18, 0
    %v26 = vsel %vm21, %v19, 0
    %vm28 = vcmask 1043456
    %v30 = vsel %vm28, %v20, 0
    %32 = vmatprep.subr.mxu0 0.0
    %33 = vmatpush1.msra.mxu0 %v30
    %34 = vmatprep.subr.mxu0 0.0
    %35 = vmatpush1.msra.mxu0 0.0
    %36 = vmatprep.subr.mxu0 0.0
    %37 = vmatpush1.msra.mxu0 0.0
    %38 = vmatprep.subr.mxu0 0.0
    %39 = vmatpush1.msra.mxu0 0.0
    %40 = vmatprep.subr.mxu0 0.0
    %41 = vmatpush1.msra.mxu0 0.0
    %42 = vmatprep.subr.mxu0 0.0
    %43 = vmatpush1.msra.mxu0 0.0
    %44 = vmatprep.subr.mxu0 0.0
    %45 = vmatpush1.msra.mxu0 0.0
    %46 = vmatprep.subr.mxu0 0.0
    %47 = vmatpush1.msra.mxu0 0.0
    %48 = vmatprep.subr.mxu0 0.0
    %49 = vmatpush1.msra.mxu0 0.0
    %50 = vmatprep.subr.mxu0 0.0
    %51 = vmatpush1.msra.mxu0 0.0
    %52 = vmatprep.subr.mxu0 0.0
    %53 = vmatpush1.msra.mxu0 0.0
    %54 = vmatprep.subr.mxu0 0.0
    %55 = vmatpush1.msra.mxu0 0.0
    %56 = vmatprep.subr.mxu0 0.0
    %57 = vmatpush1.msra.mxu0 0.0
    %58 = vmatprep.subr.mxu0 0.0
    %59 = vmatpush1.msra.mxu0 0.0
    %60 = vmatprep.subr.mxu0 0.0
    %61 = vmatpush1.msra.mxu0 0.0
    %62 = vmatprep.subr.mxu0 0.0
    %63 = vmatpush1.msra.mxu0 0.0
    %64 = vmatprep.subr.mxu0 0.0
    %65 = vmatpush1.msra.mxu0 0.0
    %66 = vmatprep.subr.mxu0 0.0
    %67 = vmatpush1.msra.mxu0 0.0
    %68 = vmatprep.subr.mxu0 0.0
    %69 = vmatpush1.msra.mxu0 0.0
    %70 = vmatprep.subr.mxu0 0.0
    %71 = vmatpush1.msra.mxu0 0.0
    %72 = vmatprep.subr.mxu0 0.0
    %73 = vmatpush1.msra.mxu0 0.0
    %74 = vmatprep.subr.mxu0 0.0
    %75 = vmatpush1.msra.mxu0 0.0
    %76 = vmatprep.subr.mxu0 0.0
    %77 = vmatpush1.msra.mxu0 0.0
    %78 = vmatprep.subr.mxu0 0.0
    %79 = vmatpush1.msra.mxu0 0.0
    %80 = vmatprep.subr.mxu0 0.0
    %81 = vmatpush1.msra.mxu0 0.0
    %82 = vmatprep.subr.mxu0 0.0
    %83 = vmatpush1.msra.mxu0 0.0
    %84 = vmatprep.subr.mxu0 0.0
    %85 = vmatpush1.msra.mxu0 0.0
    %86 = vmatprep.subr.mxu0 0.0
    %87 = vmatpush1.msra.mxu0 0.0
    %88 = vmatprep.subr.mxu0 0.0
    %89 = vmatpush1.msra.mxu0 0.0
    %90 = vmatprep.subr.mxu0 0.0
    %91 = vmatpush1.msra.mxu0 0.0
    %92 = vmatprep.subr.mxu0 0.0
    %93 = vmatpush1.msra.mxu0 0.0
    %94 = vmatprep.subr.mxu0 0.0
    %95 = vmatpush1.msra.mxu0 0.0
    %96 = vmatprep.mubr.f32.mxu0 0.0
    %97 = vmatmul.mubr.f32.gmra.mrb[0].mxu0 %v23
    %v98 = vpop.f32.mrb[0].mxu0
    %v99 = vadd.f32 0.0, %v98
    %v100 = vpop.f32.mrb[0].mxu0
    %101 = vmatprep.mubr.f32.mxu0 0.0
    %102 = vmatmul.mubr.f32.gmra.mrb[0].mxu0 %v26
    %v103 = vpop.f32.mrb[0].mxu0
    %v104 = vadd.f32 0.0, %v103
    %v105 = vpop.f32.mrb[0].mxu0
    %106 = vdwg.mxu0
    %v107 = vld [vmem:[%s2] sm:$0x1]
    %v109 = vlaneseq
    %v110 = vshrl.u32 %v109, 7
    %v111 = vsub.s32 0, %v110
    %v112 = vrot.slane %v107, %v111
    %v114 = vmul.f32 %v99, %v112
    %v115 = vmul.f32 %v104, %v112
    %v116 = vld [vmem:[%s3] sm:$0x1]
    %v118 = vlaneseq
    %v119 = vshrl.u32 %v118, 7
    %v120 = vsub.s32 0, %v119
    %v121 = vrot.slane %v116, %v120
    %v123 = vadd.f32 %v114, %v121
    %v124 = vadd.f32 %v115, %v121
    %vm125 = vcmask 261120
    %126 = vst.msk [vmem:[#allocation2] sm:$0xff] %vm125, %v123
    %127 = vst.msk [vmem:[#allocation2 + $0x8] sm:$0xff] %vm125, %v124
    // Predicated region
    $region18: #{linear_bn.1} parent=1 // pred_check
      _
    $region19: #{linear_bn.1} parent=1 // pred_check_branch
      %129 = sbr.rel (0) target = $region21
    $region20: #{linear_bn.1} parent=1 // pred_region
      %s131 = ssub.s32 256, 256
      %132 = vsyncadd [#allocation3], %s131
      %s133 = sshll.u32 [#allocation2], 4
      %s134 = int_to_ptr.vmem [resolvable:$true] %s133
      %139 = dma.vmem_to_hbm [thread:$0]  %s134, 256, %s4, [#allocation3], 128, 128, 8
    $region21: #{linear_bn.1} parent=1 // pred_fallthru
      _
    // Predicated region
    $region22: #{linear_bn.1} parent=1 // pred_check
      _
    $region23: #{linear_bn.1} parent=1 // pred_check_branch
      %141 = sbr.rel (0) target = $region25
    $region24: #{linear_bn.1} parent=1 // pred_region
      %142 = dma.done [#allocation3], 256
    $region25: #{linear_bn.1} parent=1 // pred_fallthru
      _
    %143 = vsyncpa [#allocation3], 1

</llo_original>
